<compile_context>
chip_gen: v6e
topology: v6e:2x2x1
jax: 0.10.0
libtpu: 0.0.40
codegen_flags: <defaults>
</compile_context>

<pallas_src>
import functools

import jax
import jax.numpy as jnp
import numpy as np
from jax.experimental import pallas as pl
from jax.experimental.pallas import tpu as pltpu

LN_EPS = 1e-5
VMEM_LIMIT = 48 * 1024 * 1024  # leave headroom on v7x (64 MiB physical VMEM)


# ----------------------------------------------------------------------------- kernels


def _qkv_kernel(x_ref, lnw_ref, lnb_ref, wqkv_ref, q_ref, k_ref, v_ref, *, num_heads: int):
    """One (batch, seq-tile): LayerNorm_attn + QKV projection. Q is pre-scaled by 1/sqrt(hd)."""
    x = x_ref[0]                                   # (ts, C) f32
    C = x.shape[-1]
    hd = C // num_heads

    # LayerNorm over channels (f32 elementwise)
    mu = jnp.mean(x, axis=-1, keepdims=True)
    var = jnp.mean((x - mu) ** 2, axis=-1, keepdims=True)
    xn = (x - mu) * jax.lax.rsqrt(var + LN_EPS) * lnw_ref[0] + lnb_ref[0]

    # QKV projection (no bias), bf16 MXU operands, f32 accumulation
    qkv = jnp.dot(xn.astype(jnp.bfloat16), wqkv_ref[...],
                  preferred_element_type=jnp.float32)          # (ts, 3C) f32

    scale = 1.0 / float(np.sqrt(hd))               # fold softmax scale into Q once
    q_ref[0] = (qkv[:, 0 * C:1 * C] * scale).astype(jnp.bfloat16)
    k_ref[0] = qkv[:, 1 * C:2 * C].astype(jnp.bfloat16)
    v_ref[0] = qkv[:, 2 * C:3 * C].astype(jnp.bfloat16)


def _attn_mlp_kernel(x_ref, q_ref, k_ref, v_ref,
                     wo_ref, bo_ref, lnw_ref, lnb_ref,
                     w1_ref, b1_ref, w2_ref, b2_ref,
                     o_ref,
                     m_sc, l_sc, acc_sc,
                     *, num_heads: int):
    """Fused flash-attention (online softmax over kv tiles) + output proj + MLP epilogue."""
    kv = pl.program_id(2)
    nkv = pl.num_programs(2)

    @pl.when(kv == 0)
    def _init():
        m_sc[...] = jnp.full(m_sc.shape, -jnp.inf, m_sc.dtype)
        l_sc[...] = jnp.zeros(l_sc.shape, l_sc.dtype)
        acc_sc[...] = jnp.zeros(acc_sc.shape, acc_sc.dtype)

    q = q_ref[0]                                   # (tq,  C) bf16, pre-scaled
    k = k_ref[0]                                   # (tkv, C) bf16
    v = v_ref[0]                                   # (tkv, C) bf16
    C = q.shape[-1]
    hd = C // num_heads

    # Per-head loop over contiguous 2-D slices (no 3-D reshape / relayout).
    for h in range(num_heads):
        lo, hi = h * hd, (h + 1) * hd
        s = jax.lax.dot_general(q[:, lo:hi], k[:, lo:hi],
                                (((1,), (1,)), ((), ())),
                                preferred_element_type=jnp.float32)   # (tq, tkv) f32

        m_prev = m_sc[:, h:h + 1]                  # (tq, 1)
        l_prev = l_sc[:, h:h + 1]
        m_new = jnp.maximum(m_prev, jnp.max(s, axis=-1, keepdims=True))
        alpha = jnp.exp(m_prev - m_new)
        p = jnp.exp(s - m_new)                     # (tq, tkv) f32
        l_sc[:, h:h + 1] = alpha * l_prev + jnp.sum(p, axis=-1, keepdims=True)
        m_sc[:, h:h + 1] = m_new
        acc_sc[:, lo:hi] = alpha * acc_sc[:, lo:hi] + jnp.dot(
            p.astype(jnp.bfloat16), v[:, lo:hi], preferred_element_type=jnp.float32)

    @pl.when(kv == nkv - 1)
    def _finalize():
        # Softmax normalization via approximate reciprocal (EUP) instead of divide.
        inv_l = pl.reciprocal(l_sc[...], approx=True)          # (tq, H)
        for h in range(num_heads):
            lo, hi = h * hd, (h + 1) * hd
            acc_sc[:, lo:hi] = acc_sc[:, lo:hi] * inv_l[:, h:h + 1]
        attn = acc_sc[...].astype(jnp.bfloat16)                # (tq, C)

        # Output projection (with bias) + residual (f32 residual stream)
        proj = jnp.dot(attn, wo_ref[...], preferred_element_type=jnp.float32) + bo_ref[0]
        x1 = x_ref[0] + proj                                   # (tq, C) f32

        # LayerNorm_mlp + MLP (GELU fused between the two matmuls, hidden never leaves VMEM)
        mu = jnp.mean(x1, axis=-1, keepdims=True)
        var = jnp.mean((x1 - mu) ** 2, axis=-1, keepdims=True)
        xn = (x1 - mu) * jax.lax.rsqrt(var + LN_EPS) * lnw_ref[0] + lnb_ref[0]

        h1 = jnp.dot(xn.astype(jnp.bfloat16), w1_ref[...],
                     preferred_element_type=jnp.float32) + b1_ref[0]
        h1 = jax.nn.gelu(h1, approximate=True)                 # see TODO at top re: exact erf GELU
        out = jnp.dot(h1.astype(jnp.bfloat16), w2_ref[...],
                      preferred_element_type=jnp.float32) + b2_ref[0]

        o_ref[0] = (x1 + out).astype(o_ref.dtype)


# ----------------------------------------------------------------------------- wrapper


def _seq_tile(seq_len: int, max_tile: int) -> int:
    for t in (max_tile, 512, 256, 128, 64, 32, 16):
        if t <= seq_len and seq_len % t == 0:
            return t
    return seq_len  # fall back: full sequence per program


def transformer_processor_block(x_flat, params, *, batch_size, num_heads, seq_tile=128):
    """x_flat: (B*S, C) float32. Returns (B*S, C) float32."""
    BS, C = x_flat.shape
    assert BS % batch_size == 0
    S = BS // batch_size
    assert C % num_heads == 0
    # Lane-dense channels: masked partial stores for C % 128 != 0 are up to ~4.5x slower.
    assert C % 128 == 0, "num_channels must be a multiple of 128 (pad upstream if needed)"

    x = x_flat.astype(jnp.float32).reshape(batch_size, S, C)
    ts = _seq_tile(S, seq_tile)
    tq = tkv = ts
    hidden = params["w_mlp1"].shape[1]

    bf16 = lambda w: w.astype(jnp.bfloat16)               # MXU operands in bf16 (pre-cast once)
    row = lambda p: p.reshape(1, -1).astype(jnp.float32)  # 1-D params -> (1, N)

    # ---- kernel 1: LayerNorm_attn + QKV projection -------------------------------------
    q, k, v = pl.pallas_call(
        functools.partial(_qkv_kernel, num_heads=num_heads),
        out_shape=tuple(jax.ShapeDtypeStruct((batch_size, S, C), jnp.bfloat16) for _ in range(3)),
        grid=(batch_size, S // ts),
        in_specs=[
            pl.BlockSpec((1, ts, C), lambda b, s: (b, s, 0)),
            pl.BlockSpec((1, C), lambda b, s: (0, 0)),
            pl.BlockSpec((1, C), lambda b, s: (0, 0)),
            pl.BlockSpec((C, 3 * C), lambda b, s: (0, 0)),
        ],
        out_specs=tuple(pl.BlockSpec((1, ts, C), lambda b, s: (b, s, 0)) for _ in range(3)),
        compiler_params=pltpu.CompilerParams(
            dimension_semantics=("parallel", "parallel"),
            vmem_limit_bytes=VMEM_LIMIT),
    )(x, row(params["ln_attn_w"]), row(params["ln_attn_b"]), bf16(params["w_qkv"]))

    # ---- kernel 2: fused flash attention + proj + residual + LN + MLP + residual -------
    out = pl.pallas_call(
        functools.partial(_attn_mlp_kernel, num_heads=num_heads),
        out_shape=jax.ShapeDtypeStruct((batch_size, S, C), jnp.float32),
        grid=(batch_size, S // tq, S // tkv),          # kv axis innermost (reduction)
        in_specs=[
            pl.BlockSpec((1, tq, C), lambda b, qi, ki: (b, qi, 0)),    # x residual tile
            pl.BlockSpec((1, tq, C), lambda b, qi, ki: (b, qi, 0)),    # q tile
            pl.BlockSpec((1, tkv, C), lambda b, qi, ki: (b, ki, 0)),   # k tile
            pl.BlockSpec((1, tkv, C), lambda b, qi, ki: (b, ki, 0)),   # v tile
            pl.BlockSpec((C, C), lambda b, qi, ki: (0, 0)),            # w_proj (bf16)
            pl.BlockSpec((1, C), lambda b, qi, ki: (0, 0)),            # b_proj
            pl.BlockSpec((1, C), lambda b, qi, ki: (0, 0)),            # ln_mlp_w
            pl.BlockSpec((1, C), lambda b, qi, ki: (0, 0)),            # ln_mlp_b
            pl.BlockSpec((C, hidden), lambda b, qi, ki: (0, 0)),       # w_mlp1 (bf16)
            pl.BlockSpec((1, hidden), lambda b, qi, ki: (0, 0)),       # b_mlp1
            pl.BlockSpec((hidden, C), lambda b, qi, ki: (0, 0)),       # w_mlp2 (bf16)
            pl.BlockSpec((1, C), lambda b, qi, ki: (0, 0)),            # b_mlp2
        ],
        out_specs=pl.BlockSpec((1, tq, C), lambda b, qi, ki: (b, qi, 0)),
        scratch_shapes=[
            pltpu.VMEM((tq, num_heads), jnp.float32),   # running max  m
            pltpu.VMEM((tq, num_heads), jnp.float32),   # running sum  l
            pltpu.VMEM((tq, C), jnp.float32),           # output accumulator
        ],
        compiler_params=pltpu.CompilerParams(
            dimension_semantics=("parallel", "parallel", "arbitrary"),
            vmem_limit_bytes=VMEM_LIMIT),
    )(x, q, k, v,
      bf16(params["w_proj"]), row(params["b_proj"]),
      row(params["ln_mlp_w"]), row(params["ln_mlp_b"]),
      bf16(params["w_mlp1"]), row(params["b_mlp1"]),
      bf16(params["w_mlp2"]), row(params["b_mlp2"]))

    return out.reshape(BS, C)


# ----------------------------------------------------------------------------- reference (pure JAX, f32)


def reference(x_flat, params, *, batch_size, num_heads):
    BS, C = x_flat.shape
    S = BS // batch_size
    hd = C // num_heads
    x = x_flat.reshape(batch_size, S, C)

    def ln(v, w, b):
        mu = jnp.mean(v, -1, keepdims=True)
        var = jnp.mean((v - mu) ** 2, -1, keepdims=True)
        return (v - mu) * jax.lax.rsqrt(var + LN_EPS) * w + b

    y = ln(x, params["ln_attn_w"], params["ln_attn_b"])
    qkv = y @ params["w_qkv"]
    q, k, v = jnp.split(qkv, 3, axis=-1)
    q = q.reshape(batch_size, S, num_heads, hd)
    k = k.reshape(batch_size, S, num_heads, hd)
    v = v.reshape(batch_size, S, num_heads, hd)
    sc = jnp.einsum("bqhd,bkhd->bhqk", q, k) / jnp.sqrt(jnp.float32(hd))
    p = jax.nn.softmax(sc, axis=-1)
    a = jnp.einsum("bhqk,bkhd->bqhd", p, v).reshape(batch_size, S, C)
    a = a @ params["w_proj"] + params["b_proj"]
    x = x + a

    y = ln(x, params["ln_mlp_w"], params["ln_mlp_b"])
    h = jax.nn.gelu(y @ params["w_mlp1"] + params["b_mlp1"], approximate=True)
    x = x + (h @ params["w_mlp2"] + params["b_mlp2"])
    return x.reshape(BS, C)


# ----------------------------------------------------------------------------- main

if __name__ == "__main__":
    # Small but lane-dense shapes consistent with the module (C multiple of 128; seq
    # chosen so both the q-tile and kv-tile grid axes have >1 step).
    batch_size = 2
    seq = 256
    num_channels = 128
    hidden_dim = 256
    num_heads = 4
    # window_size >= seq (full attention)

    key = jax.random.PRNGKey(0)
    ks = jax.random.split(key, 8)

    def init(k, shape, scale=0.05):
        return (scale * jax.random.normal(k, shape)).astype(jnp.float32)

    params = {
        "ln_attn_w": jnp.ones((num_channels,), jnp.float32),
        "ln_attn_b": jnp.zeros((num_channels,), jnp.float32),
        "ln_mlp_w": jnp.ones((num_channels,), jnp.float32),
        "ln_mlp_b": jnp.zeros((num_channels,), jnp.float32),
        "w_qkv": init(ks[0], (num_channels, 3 * num_channels)),     # qkv_bias=False
        "w_proj": init(ks[1], (num_channels, num_channels)),
        "b_proj": init(ks[2], (num_channels,)),
        "w_mlp1": init(ks[3], (num_channels, hidden_dim)),
        "b_mlp1": init(ks[4], (hidden_dim,)),
        "w_mlp2": init(ks[5], (hidden_dim, num_channels)),
        "b_mlp2": init(ks[6], (num_channels,)),
    }

    x = jax.random.normal(ks[7], (batch_size * seq, num_channels), jnp.float32)

    out = transformer_processor_block(x, params, batch_size=batch_size, num_heads=num_heads)
    out = jax.block_until_ready(out)

    ref = reference(x, params, batch_size=batch_size, num_heads=num_heads)
    # bf16 MXU operands with f32 accumulation -> loosened tolerance vs the f32 reference.
    np.testing.assert_allclose(np.asarray(out), np.asarray(ref), rtol=2e-2, atol=2e-2)

    print("KERNEL_OK")
</pallas_src>

<mosaic_0001>
module attributes {stable_mosaic.version = 11 : i64} {
  func.func @_qkv_kernel(%arg0: i32, %arg1: i32, %arg2: memref<1x128x128xf32, #tpu.memory_space<vmem>>, %arg3: memref<1x128xf32, #tpu.memory_space<vmem>>, %arg4: memref<1x128xf32, #tpu.memory_space<vmem>>, %arg5: memref<128x384xbf16, #tpu.memory_space<vmem>>, %arg6: memref<1x128x128xbf16, #tpu.memory_space<vmem>>, %arg7: memref<1x128x128xbf16, #tpu.memory_space<vmem>>, %arg8: memref<1x128x128xbf16, #tpu.memory_space<vmem>>) attributes {dimension_semantics = [#tpu.dimension_semantics<parallel>, #tpu.dimension_semantics<parallel>], iteration_bounds = array<i64: 2, 2>, scalar_prefetch = 0 : i64, scratch_operands = 0 : i64, tpu.core_type = #tpu.core_type<tc>, window_params = [{transform_indices = @transform_0, window_bounds = array<i64: 1, 128, 128>}, {pipeline_mode = #tpu.pipeline_mode<synchronous>, transform_indices = @transform_1, window_bounds = array<i64: 1, 128>}, {pipeline_mode = #tpu.pipeline_mode<synchronous>, transform_indices = @transform_2, window_bounds = array<i64: 1, 128>}, {pipeline_mode = #tpu.pipeline_mode<synchronous>, transform_indices = @transform_3, window_bounds = array<i64: 128, 384>}, {transform_indices = @transform_4, window_bounds = array<i64: 1, 128, 128>}, {transform_indices = @transform_5, window_bounds = array<i64: 1, 128, 128>}, {transform_indices = @transform_6, window_bounds = array<i64: 1, 128, 128>}]} {
    %c0 = arith.constant 0 : index
    %c0_0 = arith.constant 0 : index
    %c0_1 = arith.constant 0 : index
    %0 = vector.load %arg2[%c0, %c0_0, %c0_1] : memref<1x128x128xf32, #tpu.memory_space<vmem>>, vector<1x128x128xf32>
    %1 = vector.shape_cast %0 : vector<1x128x128xf32> to vector<128x128xf32>
    %cst = arith.constant dense<0.000000e+00> : vector<128xf32>
    %2 = vector.multi_reduction <add>, %1, %cst [1] : vector<128x128xf32> to vector<128xf32>
    %3 = vector.shape_cast %2 : vector<128xf32> to vector<128x1xf32>
    %cst_2 = arith.constant 1.280000e+02 : f32
    %4 = vector.broadcast %cst_2 : f32 to vector<128x1xf32>
    %5 = arith.divf %3, %4 : vector<128x1xf32>
    %6 = vector.broadcast %5 : vector<128x1xf32> to vector<128x128xf32>
    %7 = arith.subf %1, %6 : vector<128x128xf32>
    %8 = arith.mulf %7, %7 : vector<128x128xf32>
    %cst_3 = arith.constant dense<0.000000e+00> : vector<128xf32>
    %9 = vector.multi_reduction <add>, %8, %cst_3 [1] : vector<128x128xf32> to vector<128xf32>
    %10 = vector.shape_cast %9 : vector<128xf32> to vector<128x1xf32>
    %cst_4 = arith.constant 1.280000e+02 : f32
    %11 = vector.broadcast %cst_4 : f32 to vector<128x1xf32>
    %12 = arith.divf %10, %11 : vector<128x1xf32>
    %13 = vector.broadcast %5 : vector<128x1xf32> to vector<128x128xf32>
    %14 = arith.subf %1, %13 : vector<128x128xf32>
    %cst_5 = arith.constant 9.99999974E-6 : f32
    %15 = vector.broadcast %cst_5 : f32 to vector<128x1xf32>
    %16 = arith.addf %12, %15 : vector<128x1xf32>
    %17 = math.rsqrt %16 : vector<128x1xf32>
    %18 = vector.broadcast %17 : vector<128x1xf32> to vector<128x128xf32>
    %19 = arith.mulf %14, %18 : vector<128x128xf32>
    %c0_6 = arith.constant 0 : index
    %c0_7 = arith.constant 0 : index
    %20 = vector.load %arg3[%c0_6, %c0_7] : memref<1x128xf32, #tpu.memory_space<vmem>>, vector<1x128xf32>
    %21 = vector.shape_cast %20 : vector<1x128xf32> to vector<128xf32>
    %22 = vector.shape_cast %21 : vector<128xf32> to vector<1x128xf32>
    %23 = vector.broadcast %22 : vector<1x128xf32> to vector<128x128xf32>
    %24 = arith.mulf %19, %23 : vector<128x128xf32>
    %c0_8 = arith.constant 0 : index
    %c0_9 = arith.constant 0 : index
    %25 = vector.load %arg4[%c0_8, %c0_9] : memref<1x128xf32, #tpu.memory_space<vmem>>, vector<1x128xf32>
    %26 = vector.shape_cast %25 : vector<1x128xf32> to vector<128xf32>
    %27 = vector.shape_cast %26 : vector<128xf32> to vector<1x128xf32>
    %28 = vector.broadcast %27 : vector<1x128xf32> to vector<128x128xf32>
    %29 = arith.addf %24, %28 : vector<128x128xf32>
    %30 = arith.truncf %29 : vector<128x128xf32> to vector<128x128xbf16>
    %c0_10 = arith.constant 0 : index
    %c0_11 = arith.constant 0 : index
    %31 = vector.load %arg5[%c0_10, %c0_11] : memref<128x384xbf16, #tpu.memory_space<vmem>>, vector<128x384xbf16>
    %cst_12 = arith.constant dense<0.000000e+00> : vector<128x384xf32>
    %32 = tpu.matmul %30, %31, %cst_12 {dimension_numbers = #tpu.dot_dimension_numbers<[1], [0], [0], [1], [0, 0, 1, 1], [], []>} : vector<128x128xbf16>, vector<128x384xbf16>, vector<128x384xf32> -> vector<128x384xf32>
    %33 = vector.extract_strided_slice %32 {offsets = [0, 0], sizes = [128, 128], strides = [1, 1]} : vector<128x384xf32> to vector<128x128xf32>
    %cst_13 = arith.constant 0.176776692 : f32
    %34 = vector.broadcast %cst_13 : f32 to vector<128x128xf32>
    %35 = arith.mulf %33, %34 : vector<128x128xf32>
    %36 = arith.truncf %35 : vector<128x128xf32> to vector<128x128xbf16>
    %c0_14 = arith.constant 0 : index
    %c0_15 = arith.constant 0 : index
    %c0_16 = arith.constant 0 : index
    %37 = vector.load %arg6[%c0_14, %c0_15, %c0_16] : memref<1x128x128xbf16, #tpu.memory_space<vmem>>, vector<1x128x128xbf16>
    %38 = vector.shape_cast %37 : vector<1x128x128xbf16> to vector<128x128xbf16>
    %39 = vector.shape_cast %36 : vector<128x128xbf16> to vector<1x128x128xbf16>
    tpu.vector_store %arg6[%c0_14, %c0_15, %c0_16], %39 {strides = array<i32>} : memref<1x128x128xbf16, #tpu.memory_space<vmem>>, vector<1x128x128xbf16>,
    %40 = vector.extract_strided_slice %32 {offsets = [0, 128], sizes = [128, 128], strides = [1, 1]} : vector<128x384xf32> to vector<128x128xf32>
    %41 = arith.truncf %40 : vector<128x128xf32> to vector<128x128xbf16>
    %c0_17 = arith.constant 0 : index
    %c0_18 = arith.constant 0 : index
    %c0_19 = arith.constant 0 : index
    %42 = vector.load %arg7[%c0_17, %c0_18, %c0_19] : memref<1x128x128xbf16, #tpu.memory_space<vmem>>, vector<1x128x128xbf16>
    %43 = vector.shape_cast %42 : vector<1x128x128xbf16> to vector<128x128xbf16>
    %44 = vector.shape_cast %41 : vector<128x128xbf16> to vector<1x128x128xbf16>
    tpu.vector_store %arg7[%c0_17, %c0_18, %c0_19], %44 {strides = array<i32>} : memref<1x128x128xbf16, #tpu.memory_space<vmem>>, vector<1x128x128xbf16>,
    %45 = vector.extract_strided_slice %32 {offsets = [0, 256], sizes = [128, 128], strides = [1, 1]} : vector<128x384xf32> to vector<128x128xf32>
    %46 = arith.truncf %45 : vector<128x128xf32> to vector<128x128xbf16>
    %c0_20 = arith.constant 0 : index
    %c0_21 = arith.constant 0 : index
    %c0_22 = arith.constant 0 : index
    %47 = vector.load %arg8[%c0_20, %c0_21, %c0_22] : memref<1x128x128xbf16, #tpu.memory_space<vmem>>, vector<1x128x128xbf16>
    %48 = vector.shape_cast %47 : vector<1x128x128xbf16> to vector<128x128xbf16>
    %49 = vector.shape_cast %46 : vector<128x128xbf16> to vector<1x128x128xbf16>
    tpu.vector_store %arg8[%c0_20, %c0_21, %c0_22], %49 {strides = array<i32>} : memref<1x128x128xbf16, #tpu.memory_space<vmem>>, vector<1x128x128xbf16>,
    return
  }
  func.func @transform_0(%arg0: i32, %arg1: i32) -> (i32, i32, i32) {
    %c0_i32 = arith.constant 0 : i32
    %c0_i32_0 = arith.constant 0 : i32
    return %arg0, %arg1, %c0_i32 : i32, i32, i32
  }
  func.func @transform_1(%arg0: i32, %arg1: i32) -> (i32, i32) {
    %c0_i32 = arith.constant 0 : i32
    %c0_i32_0 = arith.constant 0 : i32
    %c0_i32_1 = arith.constant 0 : i32
    return %c0_i32, %c0_i32_0 : i32, i32
  }
  func.func @transform_2(%arg0: i32, %arg1: i32) -> (i32, i32) {
    %c0_i32 = arith.constant 0 : i32
    %c0_i32_0 = arith.constant 0 : i32
    %c0_i32_1 = arith.constant 0 : i32
    return %c0_i32, %c0_i32_0 : i32, i32
  }
  func.func @transform_3(%arg0: i32, %arg1: i32) -> (i32, i32) {
    %c0_i32 = arith.constant 0 : i32
    %c0_i32_0 = arith.constant 0 : i32
    %c0_i32_1 = arith.constant 0 : i32
    return %c0_i32, %c0_i32_0 : i32, i32
  }
  func.func @transform_4(%arg0: i32, %arg1: i32) -> (i32, i32, i32) {
    %c0_i32 = arith.constant 0 : i32
    %c0_i32_0 = arith.constant 0 : i32
    return %arg0, %arg1, %c0_i32 : i32, i32, i32
  }
  func.func @transform_5(%arg0: i32, %arg1: i32) -> (i32, i32, i32) {
    %c0_i32 = arith.constant 0 : i32
    %c0_i32_0 = arith.constant 0 : i32
    return %arg0, %arg1, %c0_i32 : i32, i32, i32
  }
  func.func @transform_6(%arg0: i32, %arg1: i32) -> (i32, i32, i32) {
    %c0_i32 = arith.constant 0 : i32
    %c0_i32_0 = arith.constant 0 : i32
    return %arg0, %arg1, %c0_i32 : i32, i32, i32
  }
}

</mosaic_0001>

<llo_original>
// kernel: tpu_custom_call.1
$region0: #{tpu_custom_call.1}
  #allocation0 [shape = 'u32[]', space=smem, size = 0x4, offset = 0x4, fixed_abs, tag = 'smem constant byte address 0x4 - core index']
  #allocation1 [shape = 'u32[144,128]{1,0:T(1,128)}', space=vmem, size = 0x12000, scoped, tag = 'internal scratch']
  %s0 = inlined_call_operand.hbm [shape: f32[2,256,128], index: 0, kind: input, shape index: {}]
  %s1 = inlined_call_operand.vmem [shape: f32[1,128], index: 1, kind: input, shape index: {}]
  %s2 = inlined_call_operand.vmem [shape: f32[1,128], index: 2, kind: input, shape index: {}]
  %s3 = inlined_call_operand.hbm [shape: bf16[128,384], index: 3, kind: input, shape index: {}]
  %s4 = inlined_call_operand.hbm [shape: bf16[2,256,128], index: 4, kind: output, shape index: {0}]
  %s5 = inlined_call_operand.hbm [shape: bf16[2,256,128], index: 5, kind: output, shape index: {1}]
  %s6 = inlined_call_operand.hbm [shape: bf16[2,256,128], index: 6, kind: output, shape index: {2}]
  %7 = xla_tuple %s4, %s5, %s6
  %s8 = sld [smem:[#allocation0]]
  $region73: #{tpu_custom_call.1} parent=0
    _
  %s10 = ssub.s32 1, %s8
  %s11 = scalar_select 0, %s10, %s8
  $region1: #{tpu_custom_call.1} parent=0
    #allocation2 [shape = 'u8[131072]{0}', space=vmem, size = 0x20000, scoped, tag = 'input window, operand 0']
    #allocation3 [shape = 's32[2]{0}', space=sflag, size = 0x8, scoped, tag = 'scoped memory for tpu_custom_call.1']
    #allocation4 [shape = 's32[2]{0}', space=sflag, size = 0x8, scoped, tag = 'scoped memory for tpu_custom_call.1']
    #allocation5 [shape = 'u8[98304]{0}', space=vmem, size = 0x18000, scoped, tag = 'input window, operand 3, single buffered']
    #allocation6 [shape = 's32[1]{0}', space=sflag, size = 0x4, scoped, tag = 'scoped memory for tpu_custom_call.1']
    #allocation7 [shape = 'u8[65536]{0}', space=vmem, size = 0x10000, scoped, tag = 'output window, operand 0']
    #allocation8 [shape = 'u8[65536]{0}', space=vmem, size = 0x10000, scoped, tag = 'output window, operand 1']
    #allocation9 [shape = 's32[2]{0}', space=sflag, size = 0x8, scoped, tag = 'scoped memory for tpu_custom_call.1']
    #allocation10 [shape = 'u8[65536]{0}', space=vmem, size = 0x10000, scoped, tag = 'output window, operand 2']
    %12 = vsyncpa [#allocation3], 0
    %s13 = scalar_lea.sflag [#allocation3], 1
    %14 = vsyncpa %s13, 0
    %15 = vsyncpa [#allocation6], 0
    %16 = vsyncpa [#allocation4], 0
    %s17 = scalar_lea.sflag [#allocation4], 1
    %18 = vsyncpa %s17, 0
    %19 = vsyncpa [#allocation9], 0
    %s20 = scalar_lea.sflag [#allocation9], 1
    %21 = vsyncpa %s20, 0
    loop: start=0, step=1, limit=6
    $region2: #{tpu_custom_call.1} parent=1 // loop_pre_header
      _
    $region3: #{tpu_custom_call.1} parent=1 // loop_header
      %s23 = sphi 0, %s27
      %p24 = scmp.ge.s32.totalorder %s23, 6
      %s30 = sphi 0, %s42
      %s31 = sphi 0, %s38
      %s32 = sphi 0, %s30
      %s33 = sphi 0, %s31
      %s34 = sphi 0, %s32
      %s35 = sphi 0, %s33
      %s47 = sphi 0, %s49
      %s50 = sphi 0, %s47
      %s51 = sphi 0, %s50
      %s67 = sphi 0, %s51
      %s71 = sphi 0, %s71
      %s73 = sphi 0, %s71
      %s74 = sphi 0, %s73
      %s88 = sphi 0, %s74
      %s92 = sphi 0, %s92
      %s94 = sphi 0, %s92
      %s95 = sphi 0, %s94
      %s109 = sphi 0, %s95
      %s113 = sphi 0, %s113
      %s115 = sphi 0, %s113
      %s116 = sphi 0, %s115
      %s130 = sphi 0, %s116
      %s138 = sphi 0, %s140
      %s141 = sphi 0, %s138
      %s142 = sphi 0, %s141
      %s158 = sphi 0, %s142
      %s166 = sphi 0, %s168
      %s169 = sphi 0, %s166
      %s170 = sphi 0, %s169
      %s186 = sphi 0, %s170
      %s194 = sphi 0, %s196
      %s197 = sphi 0, %s194
      %s198 = sphi 0, %s197
      %s214 = sphi 0, %s198
    $region4: #{tpu_custom_call.1} parent=1 // loop_header_branch
      %26 = sbr.rel (%p24) target = $region8
    $region5: #{tpu_custom_call.1} parent=1 // loop_body
      %s28 = ssub.s32 %s23, 1
      %s29 = ssub.s32 %s23, 2
      %s36 = sadd.s32 1, %s31
      %p37 = scmp.ge.s32.totalorder %s36, 2
      %s38 = scalar_select %p37, 0, %s36
      %s39 = sadd.s32 1, %s30
      %s40 = scalar_select %p37, %s39, %s30
      %p41 = scmp.ge.s32.totalorder %s40, 2
      %s42 = scalar_select %p41, 0, %s40
      %s43 = ssub.s32 %s30, %s42
      %s44 = ssub.s32 %s31, %s38
      %s45 = sor.u32 %s43, %s44
      %p46 = scmp.eq.s32.totalorder %s45, 0
      %s48 = sadd.s32 %s47, 1
      %s49 = scalar_select %p46, %s47, %s48
      %p52 = pneg %p46
      %p53 = scmp.eq.s32.totalorder %s23, 3
      %p54 = por %p52, %p53
      %p55 = scmp.ne.s32.totalorder %s47, %s50
      %p56 = scmp.eq.s32.totalorder %s23, 0
      %p57 = por %p55, %p56
      %p58 = scmp.ne.s32.totalorder %s47, %s50
      %p59 = scmp.eq.s32.totalorder %s28, 3
      %p60 = por %p58, %p59
      %p61 = scmp.ne.s32.totalorder %s50, %s51
      %p62 = scmp.eq.s32.totalorder %s28, 0
      %p63 = por %p61, %p62
      %p64 = scmp.ne.s32.totalorder %s50, %s51
      %p65 = scmp.eq.s32.totalorder %s29, 3
      %p66 = por %p64, %p65
      %p68 = scmp.ne.s32.totalorder %s51, %s67
      %p69 = scmp.eq.s32.totalorder %s29, 0
      %p70 = por %p68, %p69
      %s72 = sadd.s32 %s71, 1
      %p75 = scmp.eq.s32.totalorder %s23, 3
      %p76 = scmp.ne.s32.totalorder %s71, %s73
      %p77 = scmp.eq.s32.totalorder %s23, 0
      %p78 = por %p76, %p77
      %p79 = scmp.ne.s32.totalorder %s71, %s73
      %p80 = scmp.eq.s32.totalorder %s28, 3
      %p81 = por %p79, %p80
      %p82 = scmp.ne.s32.totalorder %s73, %s74
      %p83 = scmp.eq.s32.totalorder %s28, 0
      %p84 = por %p82, %p83
      %p85 = scmp.ne.s32.totalorder %s73, %s74
      %p86 = scmp.eq.s32.totalorder %s29, 3
      %p87 = por %p85, %p86
      %p89 = scmp.ne.s32.totalorder %s74, %s88
      %p90 = scmp.eq.s32.totalorder %s29, 0
      %p91 = por %p89, %p90
      %s93 = sadd.s32 %s92, 1
      %p96 = scmp.eq.s32.totalorder %s23, 3
      %p97 = scmp.ne.s32.totalorder %s92, %s94
      %p98 = scmp.eq.s32.totalorder %s23, 0
      %p99 = por %p97, %p98
      %p100 = scmp.ne.s32.totalorder %s92, %s94
      %p101 = scmp.eq.s32.totalorder %s28, 3
      %p102 = por %p100, %p101
      %p103 = scmp.ne.s32.totalorder %s94, %s95
      %p104 = scmp.eq.s32.totalorder %s28, 0
      %p105 = por %p103, %p104
      %p106 = scmp.ne.s32.totalorder %s94, %s95
      %p107 = scmp.eq.s32.totalorder %s29, 3
      %p108 = por %p106, %p107
      %p110 = scmp.ne.s32.totalorder %s95, %s109
      %p111 = scmp.eq.s32.totalorder %s29, 0
      %p112 = por %p110, %p111
      %s114 = sadd.s32 %s113, 1
      %p117 = scmp.eq.s32.totalorder %s23, 3
      %p118 = scmp.ne.s32.totalorder %s113, %s115
      %p119 = scmp.eq.s32.totalorder %s23, 0
      %p120 = por %p118, %p119
      %p121 = scmp.ne.s32.totalorder %s113, %s115
      %p122 = scmp.eq.s32.totalorder %s28, 3
      %p123 = por %p121, %p122
      %p124 = scmp.ne.s32.totalorder %s115, %s116
      %p125 = scmp.eq.s32.totalorder %s28, 0
      %p126 = por %p124, %p125
      %p127 = scmp.ne.s32.totalorder %s115, %s116
      %p128 = scmp.eq.s32.totalorder %s29, 3
      %p129 = por %p127, %p128
      %p131 = scmp.ne.s32.totalorder %s116, %s130
      %p132 = scmp.eq.s32.totalorder %s29, 0
      %p133 = por %p131, %p132
      %s134 = ssub.s32 %s30, %s42
      %s135 = ssub.s32 %s31, %s38
      %s136 = sor.u32 %s134, %s135
      %p137 = scmp.eq.s32.totalorder %s136, 0
      %s139 = sadd.s32 %s138, 1
      %s140 = scalar_select %p137, %s138, %s139
      %p143 = pneg %p137
      %p144 = scmp.eq.s32.totalorder %s23, 3
      %p145 = por %p143, %p144
      %p146 = scmp.ne.s32.totalorder %s138, %s141
      %p147 = scmp.eq.s32.totalorder %s23, 0
      %p148 = por %p146, %p147
      %p149 = scmp.ne.s32.totalorder %s138, %s141
      %p150 = scmp.eq.s32.totalorder %s28, 3
      %p151 = por %p149, %p150
      %p152 = scmp.ne.s32.totalorder %s141, %s142
      %p153 = scmp.eq.s32.totalorder %s28, 0
      %p154 = por %p152, %p153
      %p155 = scmp.ne.s32.totalorder %s141, %s142
      %p156 = scmp.eq.s32.totalorder %s29, 3
      %p157 = por %p155, %p156
      %p159 = scmp.ne.s32.totalorder %s142, %s158
      %p160 = scmp.eq.s32.totalorder %s29, 0
      %p161 = por %p159, %p160
      %s162 = ssub.s32 %s30, %s42
      %s163 = ssub.s32 %s31, %s38
      %s164 = sor.u32 %s162, %s163
      %p165 = scmp.eq.s32.totalorder %s164, 0
      %s167 = sadd.s32 %s166, 1
      %s168 = scalar_select %p165, %s166, %s167
      %p171 = pneg %p165
      %p172 = scmp.eq.s32.totalorder %s23, 3
      %p173 = por %p171, %p172
      %p174 = scmp.ne.s32.totalorder %s166, %s169
      %p175 = scmp.eq.s32.totalorder %s23, 0
      %p176 = por %p174, %p175
      %p177 = scmp.ne.s32.totalorder %s166, %s169
      %p178 = scmp.eq.s32.totalorder %s28, 3
      %p179 = por %p177, %p178
      %p180 = scmp.ne.s32.totalorder %s169, %s170
      %p181 = scmp.eq.s32.totalorder %s28, 0
      %p182 = por %p180, %p181
      %p183 = scmp.ne.s32.totalorder %s169, %s170
      %p184 = scmp.eq.s32.totalorder %s29, 3
      %p185 = por %p183, %p184
      %p187 = scmp.ne.s32.totalorder %s170, %s186
      %p188 = scmp.eq.s32.totalorder %s29, 0
      %p189 = por %p187, %p188
      %s190 = ssub.s32 %s30, %s42
      %s191 = ssub.s32 %s31, %s38
      %s192 = sor.u32 %s190, %s191
      %p193 = scmp.eq.s32.totalorder %s192, 0
      %s195 = sadd.s32 %s194, 1
      %s196 = scalar_select %p193, %s194, %s195
      %p199 = pneg %p193
      %p200 = scmp.eq.s32.totalorder %s23, 3
      %p201 = por %p199, %p200
      %p202 = scmp.ne.s32.totalorder %s194, %s197
      %p203 = scmp.eq.s32.totalorder %s23, 0
      %p204 = por %p202, %p203
      %p205 = scmp.ne.s32.totalorder %s194, %s197
      %p206 = scmp.eq.s32.totalorder %s28, 3
      %p207 = por %p205, %p206
      %p208 = scmp.ne.s32.totalorder %s197, %s198
      %p209 = scmp.eq.s32.totalorder %s28, 0
      %p210 = por %p208, %p209
      %p211 = scmp.ne.s32.totalorder %s197, %s198
      %p212 = scmp.eq.s32.totalorder %s29, 3
      %p213 = por %p211, %p212
      %p215 = scmp.ne.s32.totalorder %s198, %s214
      %p216 = scmp.eq.s32.totalorder %s29, 0
      %p217 = por %p215, %p216
      %p218 = scmp.le.s32.totalorder 1, %s23
      %p219 = scmp.lt.s32.totalorder %s23, 5
      %p220 = pnand %p218, %p219
      %p221 = pneg %p220
      // Predicated region
      $region9: #{tpu_custom_call.1} parent=5 // pred_check
        _
      $region10: #{tpu_custom_call.1} parent=5 // pred_check_branch
        %223 = sbr.rel (%p220) target = $region12
      $region11: #{tpu_custom_call.1} parent=5 // pred_region
        %s224 = ssub.s32 %s23, 1
        // Predicated region
        $region13: #{tpu_custom_call.1} parent=11 // pred_check
          %p225 = pneg %p84
        $region14: #{tpu_custom_call.1} parent=11 // pred_check_branch
          %227 = sbr.rel (%p225) target = $region16
        $region15: #{tpu_custom_call.1} parent=11 // pred_region
          _
        $region16: #{tpu_custom_call.1} parent=11 // pred_fallthru
          _
        // Predicated region
        $region17: #{tpu_custom_call.1} parent=11 // pred_check
          %p228 = pneg %p105
        $region18: #{tpu_custom_call.1} parent=11 // pred_check_branch
          %230 = sbr.rel (%p228) target = $region20
        $region19: #{tpu_custom_call.1} parent=11 // pred_region
          _
        $region20: #{tpu_custom_call.1} parent=11 // pred_fallthru
          _
        // Predicated region
        $region21: #{tpu_custom_call.1} parent=11 // pred_check
          %p231 = pneg %p126
        $region22: #{tpu_custom_call.1} parent=11 // pred_check_branch
          %233 = sbr.rel (%p231) target = $region24
        $region23: #{tpu_custom_call.1} parent=11 // pred_region
          %s235 = ssub.s32 3072, 3072
          %236 = vsyncadd [#allocation6], %s235
          %s237 = sshll.u32 [#allocation5], 4
          %s238 = int_to_ptr.vmem [resolvable:$true] %s237
          %243 = dma.hbm_to_vmem [thread:$0]  %s3, 3072, %s238, [#allocation6], 192, 192, 12
        $region24: #{tpu_custom_call.1} parent=11 // pred_fallthru
          _
      $region12: #{tpu_custom_call.1} parent=5 // pred_fallthru
        _
      %p244 = scmp.lt.s32.totalorder %s23, 4
      // Predicated region
      $region25: #{tpu_custom_call.1} parent=5 // pred_check
        %p245 = pneg %p244
      $region26: #{tpu_custom_call.1} parent=5 // pred_check_branch
        %247 = sbr.rel (%p245) target = $region28
      $region27: #{tpu_custom_call.1} parent=5 // pred_region
        // Predicated region
        $region29: #{tpu_custom_call.1} parent=27 // pred_check
          %p248 = pneg %p57
        $region30: #{tpu_custom_call.1} parent=27 // pred_check_branch
          %250 = sbr.rel (%p248) target = $region32
        $region31: #{tpu_custom_call.1} parent=27 // pred_region
          %s251 = sand.u32 %s47, 1
          %s252 = scalar_lea.sflag [#allocation3], %s251
          %s253 = sand.u32 %s47, 1
          %s254 = smul.addr %s253, 128
          %s255 = scalar_lea.vmem [#allocation2], %s254
          %s256 = smul.u32 16, %s31
          %s258 = ssub.s32 2048, 2048
          %259 = vsyncadd %s252, %s258
          %s260 = smul.addr %s30, 32
          %s261 = sadd.s32 %s256, %s260
          %s262 = smul.addr %s261, 128
          %s263 = scalar_lea.hbm %s0, %s262
          %s264 = sshll.u32 %s255, 4
          %s265 = int_to_ptr.vmem [resolvable:$true] %s264
          %270 = dma.hbm_to_vmem [thread:$0]  %s263, 2048, %s265, %s252, 128, 128, 8
        $region32: #{tpu_custom_call.1} parent=27 // pred_fallthru
          _
      $region28: #{tpu_custom_call.1} parent=5 // pred_fallthru
        _
      %p271 = scmp.le.s32.totalorder 1, %s23
      %p272 = scmp.lt.s32.totalorder %s23, 5
      %p273 = pnand %p271, %p272
      %p274 = pneg %p273
      // Predicated region
      $region33: #{tpu_custom_call.1} parent=5 // pred_check
        _
      $region34: #{tpu_custom_call.1} parent=5 // pred_check_branch
        %276 = sbr.rel (%p273) target = $region36
      $region35: #{tpu_custom_call.1} parent=5 // pred_region
        %s277 = ssub.s32 %s23, 1
        %s278 = sand.u32 %s50, 1
        %s279 = scalar_lea.sflag [#allocation3], %s278
        %s280 = sand.u32 %s50, 1
        %s281 = smul.addr %s280, 128
        %s282 = scalar_lea.vmem [#allocation2], %s281
        // Predicated region
        $region37: #{tpu_custom_call.1} parent=35 // pred_check
          %p283 = pneg %p63
        $region38: #{tpu_custom_call.1} parent=35 // pred_check_branch
          %285 = sbr.rel (%p283) target = $region40
        $region39: #{tpu_custom_call.1} parent=35 // pred_region
          %286 = dma.done %s279, 2048
        $region40: #{tpu_custom_call.1} parent=35 // pred_fallthru
          _
        // Predicated region
        $region41: #{tpu_custom_call.1} parent=35 // pred_check
          %p287 = pneg %p126
        $region42: #{tpu_custom_call.1} parent=35 // pred_check_branch
          %289 = sbr.rel (%p287) target = $region44
        $region43: #{tpu_custom_call.1} parent=35 // pred_region
          %290 = dma.done [#allocation6], 3072
        $region44: #{tpu_custom_call.1} parent=35 // pred_fallthru
          _
        %s291 = sand.u32 %s50, 1
        %s292 = scalar_lea.sflag [#allocation3], %s291
        %s293 = sand.u32 %s50, 1
        %s294 = smul.addr %s293, 128
        %s295 = scalar_lea.vmem [#allocation2], %s294
        %p296 = pneg %p63
        %p297 = pneg %p60
        %p298 = pneg %p84
        %p299 = pneg %p81
        %p300 = pneg %p105
        %p301 = pneg %p102
        %p302 = pneg %p126
        %p303 = pneg %p123
        %p304 = pneg %p154
        %p305 = pneg %p151
        %s306 = sand.u32 %s141, 1
        %s307 = scalar_lea.sflag [#allocation4], %s306
        %s308 = sand.u32 %s141, 1
        %s309 = smul.addr %s308, 64
        %s310 = scalar_lea.vmem [#allocation7], %s309
        %p311 = pneg %p182
        %p312 = pneg %p179
        %s313 = sand.u32 %s28, 1
        %s314 = scalar_lea.sflag [#allocation9], %s313
        %s315 = sand.u32 %s169, 1
        %s316 = smul.addr %s315, 64
        %s317 = scalar_lea.vmem [#allocation8], %s316
        %p318 = pneg %p210
        %p319 = pneg %p207
        %s320 = sand.u32 %s28, 1
        %s321 = scalar_lea.sflag [#allocation9], %s320
        %s322 = sand.u32 %s197, 1
        %s323 = smul.addr %s322, 64
        %s324 = scalar_lea.vmem [#allocation10], %s323
        %s325 = smul.u32 16, %s33
        %s326 = smul.u32 16, %s33
        %s327 = smul.u32 16, %s33
        %s328 = smul.u32 16, %s33
        %v330 = vld [vmem:[%s282] sm:$0xff]
        %v331 = vld [vmem:[%s282 + $0x8] sm:$0xff]
        %v332 = vld [vmem:[%s282 + $0x10] sm:$0xff]
        %v333 = vld [vmem:[%s282 + $0x18] sm:$0xff]
        %v334 = vld [vmem:[%s282 + $0x20] sm:$0xff]
        %v335 = vld [vmem:[%s282 + $0x28] sm:$0xff]
        %v336 = vld [vmem:[%s282 + $0x30] sm:$0xff]
        %v337 = vld [vmem:[%s282 + $0x38] sm:$0xff]
        %v338 = vld [vmem:[%s282 + $0x40] sm:$0xff]
        %v339 = vld [vmem:[%s282 + $0x48] sm:$0xff]
        %v340 = vld [vmem:[%s282 + $0x50] sm:$0xff]
        %v341 = vld [vmem:[%s282 + $0x58] sm:$0xff]
        %v342 = vld [vmem:[%s282 + $0x60] sm:$0xff]
        %v343 = vld [vmem:[%s282 + $0x68] sm:$0xff]
        %v344 = vld [vmem:[%s282 + $0x70] sm:$0xff]
        %v345 = vld [vmem:[%s282 + $0x78] sm:$0xff]
        %346 = vadd.xlane.f32.xlu0 %v330
        %v347 = vpop.xlane.xlu0 %346
        %348 = vadd.xlane.f32.xlu0 %v331
        %v349 = vpop.xlane.xlu0 %348
        %350 = vadd.xlane.f32.xlu0 %v332
        %v351 = vpop.xlane.xlu0 %350
        %352 = vadd.xlane.f32.xlu0 %v333
        %v353 = vpop.xlane.xlu0 %352
        %354 = vadd.xlane.f32.xlu0 %v334
        %v355 = vpop.xlane.xlu0 %354
        %356 = vadd.xlane.f32.xlu0 %v335
        %v357 = vpop.xlane.xlu0 %356
        %358 = vadd.xlane.f32.xlu0 %v336
        %v359 = vpop.xlane.xlu0 %358
        %360 = vadd.xlane.f32.xlu0 %v337
        %v361 = vpop.xlane.xlu0 %360
        %362 = vadd.xlane.f32.xlu0 %v338
        %v363 = vpop.xlane.xlu0 %362
        %364 = vadd.xlane.f32.xlu0 %v339
        %v365 = vpop.xlane.xlu0 %364
        %366 = vadd.xlane.f32.xlu0 %v340
        %v367 = vpop.xlane.xlu0 %366
        %368 = vadd.xlane.f32.xlu0 %v341
        %v369 = vpop.xlane.xlu0 %368
        %370 = vadd.xlane.f32.xlu0 %v342
        %v371 = vpop.xlane.xlu0 %370
        %372 = vadd.xlane.f32.xlu0 %v343
        %v373 = vpop.xlane.xlu0 %372
        %374 = vadd.xlane.f32.xlu0 %v344
        %v375 = vpop.xlane.xlu0 %374
        %376 = vadd.xlane.f32.xlu0 %v345
        %v377 = vpop.xlane.xlu0 %376
        %v378 = vrcp.pop 128.0
        %v379 = vmul.f32 %v347, %v378
        %v380 = vmul.f32 %v349, %v378
        %v381 = vmul.f32 %v351, %v378
        %v382 = vmul.f32 %v353, %v378
        %v383 = vmul.f32 %v355, %v378
        %v384 = vmul.f32 %v357, %v378
        %v385 = vmul.f32 %v359, %v378
        %v386 = vmul.f32 %v361, %v378
        %v387 = vmul.f32 %v363, %v378
        %v388 = vmul.f32 %v365, %v378
        %v389 = vmul.f32 %v367, %v378
        %v390 = vmul.f32 %v369, %v378
        %v391 = vmul.f32 %v371, %v378
        %v392 = vmul.f32 %v373, %v378
        %v393 = vmul.f32 %v375, %v378
        %v394 = vmul.f32 %v377, %v378
        %v395 = vsub.f32 %v330, %v379
        %v396 = vsub.f32 %v331, %v380
        %v397 = vsub.f32 %v332, %v381
        %v398 = vsub.f32 %v333, %v382
        %v399 = vsub.f32 %v334, %v383
        %v400 = vsub.f32 %v335, %v384
        %v401 = vsub.f32 %v336, %v385
        %v402 = vsub.f32 %v337, %v386
        %v403 = vsub.f32 %v338, %v387
        %v404 = vsub.f32 %v339, %v388
        %v405 = vsub.f32 %v340, %v389
        %v406 = vsub.f32 %v341, %v390
        %v407 = vsub.f32 %v342, %v391
        %v408 = vsub.f32 %v343, %v392
        %v409 = vsub.f32 %v344, %v393
        %v410 = vsub.f32 %v345, %v394
        %v411 = vmul.f32 %v395, %v395
        %v412 = vmul.f32 %v396, %v396
        %v413 = vmul.f32 %v397, %v397
        %v414 = vmul.f32 %v398, %v398
        %v415 = vmul.f32 %v399, %v399
        %v416 = vmul.f32 %v400, %v400
        %v417 = vmul.f32 %v401, %v401
        %v418 = vmul.f32 %v402, %v402
        %v419 = vmul.f32 %v403, %v403
        %v420 = vmul.f32 %v404, %v404
        %v421 = vmul.f32 %v405, %v405
        %v422 = vmul.f32 %v406, %v406
        %v423 = vmul.f32 %v407, %v407
        %v424 = vmul.f32 %v408, %v408
        %v425 = vmul.f32 %v409, %v409
        %v426 = vmul.f32 %v410, %v410
        %427 = vadd.xlane.f32.xlu0 %v411
        %v428 = vpop.xlane.xlu0 %427
        %429 = vadd.xlane.f32.xlu0 %v412
        %v430 = vpop.xlane.xlu0 %429
        %431 = vadd.xlane.f32.xlu0 %v413
        %v432 = vpop.xlane.xlu0 %431
        %433 = vadd.xlane.f32.xlu0 %v414
        %v434 = vpop.xlane.xlu0 %433
        %435 = vadd.xlane.f32.xlu0 %v415
        %v436 = vpop.xlane.xlu0 %435
        %437 = vadd.xlane.f32.xlu0 %v416
        %v438 = vpop.xlane.xlu0 %437
        %439 = vadd.xlane.f32.xlu0 %v417
        %v440 = vpop.xlane.xlu0 %439
        %441 = vadd.xlane.f32.xlu0 %v418
        %v442 = vpop.xlane.xlu0 %441
        %443 = vadd.xlane.f32.xlu0 %v419
        %v444 = vpop.xlane.xlu0 %443
        %445 = vadd.xlane.f32.xlu0 %v420
        %v446 = vpop.xlane.xlu0 %445
        %447 = vadd.xlane.f32.xlu0 %v421
        %v448 = vpop.xlane.xlu0 %447
        %449 = vadd.xlane.f32.xlu0 %v422
        %v450 = vpop.xlane.xlu0 %449
        %451 = vadd.xlane.f32.xlu0 %v423
        %v452 = vpop.xlane.xlu0 %451
        %453 = vadd.xlane.f32.xlu0 %v424
        %v454 = vpop.xlane.xlu0 %453
        %455 = vadd.xlane.f32.xlu0 %v425
        %v456 = vpop.xlane.xlu0 %455
        %457 = vadd.xlane.f32.xlu0 %v426
        %v458 = vpop.xlane.xlu0 %457
        %v459 = vmul.f32 %v428, %v378
        %v460 = vmul.f32 %v430, %v378
        %v461 = vmul.f32 %v432, %v378
        %v462 = vmul.f32 %v434, %v378
        %v463 = vmul.f32 %v436, %v378
        %v464 = vmul.f32 %v438, %v378
        %v465 = vmul.f32 %v440, %v378
        %v466 = vmul.f32 %v442, %v378
        %v467 = vmul.f32 %v444, %v378
        %v468 = vmul.f32 %v446, %v378
        %v469 = vmul.f32 %v448, %v378
        %v470 = vmul.f32 %v450, %v378
        %v471 = vmul.f32 %v452, %v378
        %v472 = vmul.f32 %v454, %v378
        %v473 = vmul.f32 %v456, %v378
        %v474 = vmul.f32 %v458, %v378
        %v475 = vadd.f32 %v459, 1e-05
        %v476 = vadd.f32 %v460, 1e-05
        %v477 = vadd.f32 %v461, 1e-05
        %v478 = vadd.f32 %v462, 1e-05
        %v479 = vadd.f32 %v463, 1e-05
        %v480 = vadd.f32 %v464, 1e-05
        %v481 = vadd.f32 %v465, 1e-05
        %v482 = vadd.f32 %v466, 1e-05
        %v483 = vadd.f32 %v467, 1e-05
        %v484 = vadd.f32 %v468, 1e-05
        %v485 = vadd.f32 %v469, 1e-05
        %v486 = vadd.f32 %v470, 1e-05
        %v487 = vadd.f32 %v471, 1e-05
        %v488 = vadd.f32 %v472, 1e-05
        %v489 = vadd.f32 %v473, 1e-05
        %v490 = vadd.f32 %v474, 1e-05
        %v491 = vrsqrt.pop %v475
        %v492 = vrsqrt.pop %v476
        %v493 = vrsqrt.pop %v477
        %v494 = vrsqrt.pop %v478
        %v495 = vrsqrt.pop %v479
        %v496 = vrsqrt.pop %v480
        %v497 = vrsqrt.pop %v481
        %v498 = vrsqrt.pop %v482
        %v499 = vrsqrt.pop %v483
        %v500 = vrsqrt.pop %v484
        %v501 = vrsqrt.pop %v485
        %v502 = vrsqrt.pop %v486
        %v503 = vrsqrt.pop %v487
        %v504 = vrsqrt.pop %v488
        %v505 = vrsqrt.pop %v489
        %v506 = vrsqrt.pop %v490
        %v507 = vmul.f32 %v395, %v491
        %v508 = vmul.f32 %v396, %v492
        %v509 = vmul.f32 %v397, %v493
        %v510 = vmul.f32 %v398, %v494
        %v511 = vmul.f32 %v399, %v495
        %v512 = vmul.f32 %v400, %v496
        %v513 = vmul.f32 %v401, %v497
        %v514 = vmul.f32 %v402, %v498
        %v515 = vmul.f32 %v403, %v499
        %v516 = vmul.f32 %v404, %v500
        %v517 = vmul.f32 %v405, %v501
        %v518 = vmul.f32 %v406, %v502
        %v519 = vmul.f32 %v407, %v503
        %v520 = vmul.f32 %v408, %v504
        %v521 = vmul.f32 %v409, %v505
        %v522 = vmul.f32 %v410, %v506
        %v523 = vld [vmem:[%s1] sm:$0x1]
        %v525 = vlaneseq
        %v526 = vshrl.u32 %v525, 7
        %v527 = vsub.s32 0, %v526
        %v528 = vrot.slane %v523, %v527
        %v530 = vmul.f32 %v507, %v528
        %v531 = vmul.f32 %v508, %v528
        %v532 = vmul.f32 %v509, %v528
        %v533 = vmul.f32 %v510, %v528
        %v534 = vmul.f32 %v511, %v528
        %v535 = vmul.f32 %v512, %v528
        %v536 = vmul.f32 %v513, %v528
        %v537 = vmul.f32 %v514, %v528
        %v538 = vmul.f32 %v515, %v528
        %v539 = vmul.f32 %v516, %v528
        %v540 = vmul.f32 %v517, %v528
        %v541 = vmul.f32 %v518, %v528
        %v542 = vmul.f32 %v519, %v528
        %v543 = vmul.f32 %v520, %v528
        %v544 = vmul.f32 %v521, %v528
        %v545 = vmul.f32 %v522, %v528
        %v546 = vld [vmem:[%s2] sm:$0x1]
        %v548 = vlaneseq
        %v549 = vshrl.u32 %v548, 7
        %v550 = vsub.s32 0, %v549
        %v551 = vrot.slane %v546, %v550
        %v553 = vadd.f32 %v530, %v551
        %v554 = vadd.f32 %v531, %v551
        %v555 = vadd.f32 %v532, %v551
        %v556 = vadd.f32 %v533, %v551
        %v557 = vadd.f32 %v534, %v551
        %v558 = vadd.f32 %v535, %v551
        %v559 = vadd.f32 %v536, %v551
        %v560 = vadd.f32 %v537, %v551
        %v561 = vadd.f32 %v538, %v551
        %v562 = vadd.f32 %v539, %v551
        %v563 = vadd.f32 %v540, %v551
        %v564 = vadd.f32 %v541, %v551
        %v565 = vadd.f32 %v542, %v551
        %v566 = vadd.f32 %v543, %v551
        %v567 = vadd.f32 %v544, %v551
        %v568 = vadd.f32 %v545, %v551
        %v569 = vpack.c.bf16 %v554, %v553
        %v570 = vpack.c.bf16 %v556, %v555
        %v571 = vpack.c.bf16 %v558, %v557
        %v572 = vpack.c.bf16 %v560, %v559
        %v573 = vpack.c.bf16 %v562, %v561
        %v574 = vpack.c.bf16 %v564, %v563
        %v575 = vpack.c.bf16 %v566, %v565
        %v576 = vpack.c.bf16 %v568, %v567
        %v577 = vld [vmem:[#allocation5] sm:$0xff]
        %v578 = vld [vmem:[#allocation5 + $0x8] sm:$0xf]
        %v579 = vld [vmem:[#allocation5 + $0xc] sm:$0xff]
        %v580 = vld [vmem:[#allocation5 + $0x14] sm:$0xf]
        %v581 = vld [vmem:[#allocation5 + $0x18] sm:$0xff]
        %v582 = vld [vmem:[#allocation5 + $0x20] sm:$0xf]
        %v583 = vld [vmem:[#allocation5 + $0x24] sm:$0xff]
        %v584 = vld [vmem:[#allocation5 + $0x2c] sm:$0xf]
        %v585 = vld [vmem:[#allocation5 + $0x30] sm:$0xff]
        %v586 = vld [vmem:[#allocation5 + $0x38] sm:$0xf]
        %v587 = vld [vmem:[#allocation5 + $0x3c] sm:$0xff]
        %v588 = vld [vmem:[#allocation5 + $0x44] sm:$0xf]
        %v589 = vld [vmem:[#allocation5 + $0x48] sm:$0xff]
        %v590 = vld [vmem:[#allocation5 + $0x50] sm:$0xf]
        %v591 = vld [vmem:[#allocation5 + $0x54] sm:$0xff]
        %v592 = vld [vmem:[#allocation5 + $0x5c] sm:$0xf]
        %v593 = vld [vmem:[#allocation5 + $0x60] sm:$0xff]
        %v594 = vld [vmem:[#allocation5 + $0x68] sm:$0xf]
        %v595 = vld [vmem:[#allocation5 + $0x6c] sm:$0xff]
        %v596 = vld [vmem:[#allocation5 + $0x74] sm:$0xf]
        %v597 = vld [vmem:[#allocation5 + $0x78] sm:$0xff]
        %v598 = vld [vmem:[#allocation5 + $0x80] sm:$0xf]
        %v599 = vld [vmem:[#allocation5 + $0x84] sm:$0xff]
        %v600 = vld [vmem:[#allocation5 + $0x8c] sm:$0xf]
        %v601 = vld [vmem:[#allocation5 + $0x90] sm:$0xff]
        %v602 = vld [vmem:[#allocation5 + $0x98] sm:$0xf]
        %v603 = vld [vmem:[#allocation5 + $0x9c] sm:$0xff]
        %v604 = vld [vmem:[#allocation5 + $0xa4] sm:$0xf]
        %v605 = vld [vmem:[#allocation5 + $0xa8] sm:$0xff]
        %v606 = vld [vmem:[#allocation5 + $0xb0] sm:$0xf]
        %v607 = vld [vmem:[#allocation5 + $0xb4] sm:$0xff]
        %v608 = vld [vmem:[#allocation5 + $0xbc] sm:$0xf]
        %v641 = vunpack.c.l.b16 %v577
        %v642 = vunpack.c.h.b16 %v577
        %v643 = vunpack.c.l.b16 %v578
        %v644 = vunpack.c.l.b16 %v579
        %v645 = vunpack.c.h.b16 %v579
        %v646 = vunpack.c.l.b16 %v580
        %v647 = vunpack.c.l.b16 %v581
        %v648 = vunpack.c.h.b16 %v581
        %v649 = vunpack.c.l.b16 %v582
        %v650 = vunpack.c.l.b16 %v583
        %v651 = vunpack.c.h.b16 %v583
        %v652 = vunpack.c.l.b16 %v584
        %v653 = vunpack.c.l.b16 %v585
        %v654 = vunpack.c.h.b16 %v585
        %v655 = vunpack.c.l.b16 %v586
        %v656 = vunpack.c.l.b16 %v587
        %v657 = vunpack.c.h.b16 %v587
        %v658 = vunpack.c.l.b16 %v588
        %v659 = vunpack.c.l.b16 %v589
        %v660 = vunpack.c.h.b16 %v589
        %v661 = vunpack.c.l.b16 %v590
        %v662 = vunpack.c.l.b16 %v591
        %v663 = vunpack.c.h.b16 %v591
        %v664 = vunpack.c.l.b16 %v592
        %v665 = vunpack.c.l.b16 %v593
        %v666 = vunpack.c.h.b16 %v593
        %v667 = vunpack.c.l.b16 %v594
        %v668 = vunpack.c.l.b16 %v595
        %v669 = vunpack.c.h.b16 %v595
        %v670 = vunpack.c.l.b16 %v596
        %v671 = vunpack.c.l.b16 %v597
        %v672 = vunpack.c.h.b16 %v597
        %v673 = vunpack.c.l.b16 %v598
        %v674 = vunpack.c.l.b16 %v599
        %v675 = vunpack.c.h.b16 %v599
        %v676 = vunpack.c.l.b16 %v600
        %v677 = vunpack.c.l.b16 %v601
        %v678 = vunpack.c.h.b16 %v601
        %v679 = vunpack.c.l.b16 %v602
        %v680 = vunpack.c.l.b16 %v603
        %v681 = vunpack.c.h.b16 %v603
        %v682 = vunpack.c.l.b16 %v604
        %v683 = vunpack.c.l.b16 %v605
        %v684 = vunpack.c.h.b16 %v605
        %v685 = vunpack.c.l.b16 %v606
        %v686 = vunpack.c.l.b16 %v607
        %v687 = vunpack.c.h.b16 %v607
        %v688 = vunpack.c.l.b16 %v608
        %v689 = vpack.c.b16 %v644, %v641
        %v690 = vpack.c.b16 %v645, %v642
        %v691 = vpack.c.b16 %v646, %v643
        %v692 = vpack.c.b16 %v650, %v647
        %v693 = vpack.c.b16 %v651, %v648
        %v694 = vpack.c.b16 %v652, %v649
        %v695 = vpack.c.b16 %v656, %v653
        %v696 = vpack.c.b16 %v657, %v654
        %v697 = vpack.c.b16 %v658, %v655
        %v698 = vpack.c.b16 %v662, %v659
        %v699 = vpack.c.b16 %v663, %v660
        %v700 = vpack.c.b16 %v664, %v661
        %v701 = vpack.c.b16 %v668, %v665
        %v702 = vpack.c.b16 %v669, %v666
        %v703 = vpack.c.b16 %v670, %v667
        %v704 = vpack.c.b16 %v674, %v671
        %v705 = vpack.c.b16 %v675, %v672
        %v706 = vpack.c.b16 %v676, %v673
        %v707 = vpack.c.b16 %v680, %v677
        %v708 = vpack.c.b16 %v681, %v678
        %v709 = vpack.c.b16 %v682, %v679
        %v710 = vpack.c.b16 %v686, %v683
        %v711 = vpack.c.b16 %v687, %v684
        %v712 = vpack.c.b16 %v688, %v685
        %737 = vmatprep.subr.bf16.mxu0 %v711
        %738 = vmatpush1.bf16.msra.mxu0 %v710
        %739 = vmatprep.subr.bf16.mxu0 %v708
        %740 = vmatpush1.bf16.msra.mxu0 %v707
        %741 = vmatprep.subr.bf16.mxu0 %v705
        %742 = vmatpush1.bf16.msra.mxu0 %v704
        %743 = vmatprep.subr.bf16.mxu0 %v702
        %744 = vmatpush1.bf16.msra.mxu0 %v701
        %745 = vmatprep.subr.bf16.mxu0 %v699
        %746 = vmatpush1.bf16.msra.mxu0 %v698
        %747 = vmatprep.subr.bf16.mxu0 %v696
        %748 = vmatpush1.bf16.msra.mxu0 %v695
        %749 = vmatprep.subr.bf16.mxu0 %v693
        %750 = vmatpush1.bf16.msra.mxu0 %v692
        %751 = vmatprep.subr.bf16.mxu0 %v690
        %752 = vmatpush1.bf16.msra.mxu0 %v689
        %753 = vmatprep.subr.bf16.mxu0 0
        %754 = vmatpush2.bf16.msra.mxu0 0
        %755 = vmatprep.subr.bf16.mxu0 0
        %756 = vmatpush2.bf16.msra.mxu0 0
        %757 = vmatprep.subr.bf16.mxu0 0
        %758 = vmatpush2.bf16.msra.mxu0 0
        %759 = vmatprep.subr.bf16.mxu0 0
        %760 = vmatpush2.bf16.msra.mxu0 0
        %761 = vmatprep.subr.bf16.mxu0 0
        %762 = vmatpush2.bf16.msra.mxu0 0
        %763 = vmatprep.subr.bf16.mxu0 0
        %764 = vmatpush2.bf16.msra.mxu0 0
        %765 = vmatprep.subr.bf16.mxu0 0
        %766 = vmatpush2.bf16.msra.mxu0 0
        %767 = vmatprep.subr.bf16.mxu0 0
        %768 = vmatpush2.bf16.msra.mxu0 0
        %769 = vmatprep.mubr.bf16.mxu0 0
        %770 = vmatmul.mubr.bf16.gmra.mxu0 %v569
        %v771 = vpop.f32.mrf.mxu0
        %v772 = vadd.f32 0.0, %v771
        %v773 = vpop.f32.mrf.mxu0
        %v774 = vadd.f32 0.0, %v773
        %v775 = vpop.f32.mrf.mxu0
        %v776 = vadd.f32 0.0, %v775
        %v777 = vpop.f32.mrf.mxu0
        %v778 = vadd.f32 0.0, %v777
        %779 = vmatprep.mubr.bf16.mxu0 0
        %780 = vmatmul.mubr.bf16.gmra.mxu0 %v570
        %v781 = vpop.f32.mrf.mxu0
        %v782 = vadd.f32 0.0, %v781
        %v783 = vpop.f32.mrf.mxu0
        %v784 = vadd.f32 0.0, %v783
        %v785 = vpop.f32.mrf.mxu0
        %v786 = vadd.f32 0.0, %v785
        %v787 = vpop.f32.mrf.mxu0
        %v788 = vadd.f32 0.0, %v787
        %789 = vmatprep.mubr.bf16.mxu0 0
        %790 = vmatmul.mubr.bf16.gmra.mxu0 %v571
        %v791 = vpop.f32.mrf.mxu0
        %v792 = vadd.f32 0.0, %v791
        %v793 = vpop.f32.mrf.mxu0
        %v794 = vadd.f32 0.0, %v793
        %v795 = vpop.f32.mrf.mxu0
        %v796 = vadd.f32 0.0, %v795
        %v797 = vpop.f32.mrf.mxu0
        %v798 = vadd.f32 0.0, %v797
        %799 = vmatprep.mubr.bf16.mxu0 0
        %800 = vmatmul.mubr.bf16.gmra.mxu0 %v572
        %v801 = vpop.f32.mrf.mxu0
        %v802 = vadd.f32 0.0, %v801
        %v803 = vpop.f32.mrf.mxu0
        %v804 = vadd.f32 0.0, %v803
        %v805 = vpop.f32.mrf.mxu0
        %v806 = vadd.f32 0.0, %v805
        %v807 = vpop.f32.mrf.mxu0
        %v808 = vadd.f32 0.0, %v807
        %809 = vmatprep.mubr.bf16.mxu0 0
        %810 = vmatmul.mubr.bf16.gmra.mxu0 %v573
        %v811 = vpop.f32.mrf.mxu0
        %v812 = vadd.f32 0.0, %v811
        %v813 = vpop.f32.mrf.mxu0
        %v814 = vadd.f32 0.0, %v813
        %v815 = vpop.f32.mrf.mxu0
        %v816 = vadd.f32 0.0, %v815
        %v817 = vpop.f32.mrf.mxu0
        %v818 = vadd.f32 0.0, %v817
        %819 = vmatprep.mubr.bf16.mxu0 0
        %820 = vmatmul.mubr.bf16.gmra.mxu0 %v574
        %v821 = vpop.f32.mrf.mxu0
        %v822 = vadd.f32 0.0, %v821
        %v823 = vpop.f32.mrf.mxu0
        %v824 = vadd.f32 0.0, %v823
        %v825 = vpop.f32.mrf.mxu0
        %v826 = vadd.f32 0.0, %v825
        %v827 = vpop.f32.mrf.mxu0
        %v828 = vadd.f32 0.0, %v827
        %829 = vmatprep.mubr.bf16.mxu0 0
        %830 = vmatmul.mubr.bf16.gmra.mxu0 %v575
        %v831 = vpop.f32.mrf.mxu0
        %v832 = vadd.f32 0.0, %v831
        %v833 = vpop.f32.mrf.mxu0
        %v834 = vadd.f32 0.0, %v833
        %v835 = vpop.f32.mrf.mxu0
        %v836 = vadd.f32 0.0, %v835
        %v837 = vpop.f32.mrf.mxu0
        %v838 = vadd.f32 0.0, %v837
        %839 = vmatprep.mubr.bf16.mxu0 0
        %840 = vmatmul.mubr.bf16.gmra.mxu0 %v576
        %v841 = vpop.f32.mrf.mxu0
        %v842 = vadd.f32 0.0, %v841
        %v843 = vpop.f32.mrf.mxu0
        %v844 = vadd.f32 0.0, %v843
        %v845 = vpop.f32.mrf.mxu0
        %v846 = vadd.f32 0.0, %v845
        %v847 = vpop.f32.mrf.mxu0
        %v848 = vadd.f32 0.0, %v847
        %849 = vdwg.mxu0
        %850 = vmatprep.subr.bf16.mxu0 0
        %851 = vmatpush1.bf16.msra.mxu0 %v712
        %852 = vmatprep.subr.bf16.mxu0 0
        %853 = vmatpush1.bf16.msra.mxu0 %v709
        %854 = vmatprep.subr.bf16.mxu0 0
        %855 = vmatpush1.bf16.msra.mxu0 %v706
        %856 = vmatprep.subr.bf16.mxu0 0
        %857 = vmatpush1.bf16.msra.mxu0 %v703
        %858 = vmatprep.subr.bf16.mxu0 0
        %859 = vmatpush1.bf16.msra.mxu0 %v700
        %860 = vmatprep.subr.bf16.mxu0 0
        %861 = vmatpush1.bf16.msra.mxu0 %v697
        %862 = vmatprep.subr.bf16.mxu0 0
        %863 = vmatpush1.bf16.msra.mxu0 %v694
        %864 = vmatprep.subr.bf16.mxu0 0
        %865 = vmatpush1.bf16.msra.mxu0 %v691
        %866 = vmatprep.subr.bf16.mxu0 0
        %867 = vmatpush2.bf16.msra.mxu0 0
        %868 = vmatprep.subr.bf16.mxu0 0
        %869 = vmatpush2.bf16.msra.mxu0 0
        %870 = vmatprep.subr.bf16.mxu0 0
        %871 = vmatpush2.bf16.msra.mxu0 0
        %872 = vmatprep.subr.bf16.mxu0 0
        %873 = vmatpush2.bf16.msra.mxu0 0
        %874 = vmatprep.subr.bf16.mxu0 0
        %875 = vmatpush2.bf16.msra.mxu0 0
        %876 = vmatprep.subr.bf16.mxu0 0
        %877 = vmatpush2.bf16.msra.mxu0 0
        %878 = vmatprep.subr.bf16.mxu0 0
        %879 = vmatpush2.bf16.msra.mxu0 0
        %880 = vmatprep.subr.bf16.mxu0 0
        %881 = vmatpush2.bf16.msra.mxu0 0
        %882 = vmatprep.mubr.bf16.mxu0 0
        %883 = vmatmul.mubr.bf16.gmra.mxu0 %v569
        %v884 = vpop.f32.mrf.mxu0
        %v885 = vadd.f32 0.0, %v884
        %v886 = vpop.f32.mrf.mxu0
        %v887 = vpop.f32.mrf.mxu0
        %v888 = vadd.f32 0.0, %v887
        %v889 = vpop.f32.mrf.mxu0
        %890 = vmatprep.mubr.bf16.mxu0 0
        %891 = vmatmul.mubr.bf16.gmra.mxu0 %v570
        %v892 = vpop.f32.mrf.mxu0
        %v893 = vadd.f32 0.0, %v892
        %v894 = vpop.f32.mrf.mxu0
        %v895 = vpop.f32.mrf.mxu0
        %v896 = vadd.f32 0.0, %v895
        %v897 = vpop.f32.mrf.mxu0
        %898 = vmatprep.mubr.bf16.mxu0 0
        %899 = vmatmul.mubr.bf16.gmra.mxu0 %v571
        %v900 = vpop.f32.mrf.mxu0
        %v901 = vadd.f32 0.0, %v900
        %v902 = vpop.f32.mrf.mxu0
        %v903 = vpop.f32.mrf.mxu0
        %v904 = vadd.f32 0.0, %v903
        %v905 = vpop.f32.mrf.mxu0
        %906 = vmatprep.mubr.bf16.mxu0 0
        %907 = vmatmul.mubr.bf16.gmra.mxu0 %v572
        %v908 = vpop.f32.mrf.mxu0
        %v909 = vadd.f32 0.0, %v908
        %v910 = vpop.f32.mrf.mxu0
        %v911 = vpop.f32.mrf.mxu0
        %v912 = vadd.f32 0.0, %v911
        %v913 = vpop.f32.mrf.mxu0
        %914 = vmatprep.mubr.bf16.mxu0 0
        %915 = vmatmul.mubr.bf16.gmra.mxu0 %v573
        %v916 = vpop.f32.mrf.mxu0
        %v917 = vadd.f32 0.0, %v916
        %v918 = vpop.f32.mrf.mxu0
        %v919 = vpop.f32.mrf.mxu0
        %v920 = vadd.f32 0.0, %v919
        %v921 = vpop.f32.mrf.mxu0
        %922 = vmatprep.mubr.bf16.mxu0 0
        %923 = vmatmul.mubr.bf16.gmra.mxu0 %v574
        %v924 = vpop.f32.mrf.mxu0
        %v925 = vadd.f32 0.0, %v924
        %v926 = vpop.f32.mrf.mxu0
        %v927 = vpop.f32.mrf.mxu0
        %v928 = vadd.f32 0.0, %v927
        %v929 = vpop.f32.mrf.mxu0
        %930 = vmatprep.mubr.bf16.mxu0 0
        %931 = vmatmul.mubr.bf16.gmra.mxu0 %v575
        %v932 = vpop.f32.mrf.mxu0
        %v933 = vadd.f32 0.0, %v932
        %v934 = vpop.f32.mrf.mxu0
        %v935 = vpop.f32.mrf.mxu0
        %v936 = vadd.f32 0.0, %v935
        %v937 = vpop.f32.mrf.mxu0
        %938 = vmatprep.mubr.bf16.mxu0 0
        %939 = vmatmul.mubr.bf16.gmra.mxu0 %v576
        %v940 = vpop.f32.mrf.mxu0
        %v941 = vadd.f32 0.0, %v940
        %v942 = vpop.f32.mrf.mxu0
        %v943 = vpop.f32.mrf.mxu0
        %v944 = vadd.f32 0.0, %v943
        %v945 = vpop.f32.mrf.mxu0
        %946 = vdwg.mxu0
        %v947 = vmul.f32 %v772, 0.17677669
        %v948 = vmul.f32 %v776, 0.17677669
        %v949 = vmul.f32 %v782, 0.17677669
        %v950 = vmul.f32 %v786, 0.17677669
        %v951 = vmul.f32 %v792, 0.17677669
        %v952 = vmul.f32 %v796, 0.17677669
        %v953 = vmul.f32 %v802, 0.17677669
        %v954 = vmul.f32 %v806, 0.17677669
        %v955 = vmul.f32 %v812, 0.17677669
        %v956 = vmul.f32 %v816, 0.17677669
        %v957 = vmul.f32 %v822, 0.17677669
        %v958 = vmul.f32 %v826, 0.17677669
        %v959 = vmul.f32 %v832, 0.17677669
        %v960 = vmul.f32 %v836, 0.17677669
        %v961 = vmul.f32 %v842, 0.17677669
        %v962 = vmul.f32 %v846, 0.17677669
        %v963 = vpack.c.bf16 %v948, %v947
        %v964 = vpack.c.bf16 %v950, %v949
        %v965 = vpack.c.bf16 %v952, %v951
        %v966 = vpack.c.bf16 %v954, %v953
        %v967 = vpack.c.bf16 %v956, %v955
        %v968 = vpack.c.bf16 %v958, %v957
        %v969 = vpack.c.bf16 %v960, %v959
        %v970 = vpack.c.bf16 %v962, %v961
        %v979 = vunpack.c.l.b16 %v963
        %v980 = vunpack.c.h.b16 %v963
        %v981 = vunpack.c.l.b16 %v964
        %v982 = vunpack.c.h.b16 %v964
        %v983 = vunpack.c.l.b16 %v965
        %v984 = vunpack.c.h.b16 %v965
        %v985 = vunpack.c.l.b16 %v966
        %v986 = vunpack.c.h.b16 %v966
        %v987 = vunpack.c.l.b16 %v967
        %v988 = vunpack.c.h.b16 %v967
        %v989 = vunpack.c.l.b16 %v968
        %v990 = vunpack.c.h.b16 %v968
        %v991 = vunpack.c.l.b16 %v969
        %v992 = vunpack.c.h.b16 %v969
        %v993 = vunpack.c.l.b16 %v970
        %v994 = vunpack.c.h.b16 %v970
        %v995 = vpack.c.b16 %v979, %v979
        %v996 = vpack.c.b16 %v980, %v980
        %v997 = vpack.c.b16 %v981, %v981
        %v998 = vpack.c.b16 %v982, %v982
        %v999 = vpack.c.b16 %v983, %v983
        %v1000 = vpack.c.b16 %v984, %v984
        %v1001 = vpack.c.b16 %v985, %v985
        %v1002 = vpack.c.b16 %v986, %v986
        %v1003 = vpack.c.b16 %v987, %v987
        %v1004 = vpack.c.b16 %v988, %v988
        %v1005 = vpack.c.b16 %v989, %v989
        %v1006 = vpack.c.b16 %v990, %v990
        %v1007 = vpack.c.b16 %v991, %v991
        %v1008 = vpack.c.b16 %v992, %v992
        %v1009 = vpack.c.b16 %v993, %v993
        %v1010 = vpack.c.b16 %v994, %v994
        %1027 = vst [vmem:[%s310] sm:$0xf] %v995
        %1028 = vst [vmem:[%s310 + $0x4] sm:$0xf] %v996
        %1029 = vst [vmem:[%s310 + $0x8] sm:$0xf] %v997
        %1030 = vst [vmem:[%s310 + $0xc] sm:$0xf] %v998
        %1031 = vst [vmem:[%s310 + $0x10] sm:$0xf] %v999
        %1032 = vst [vmem:[%s310 + $0x14] sm:$0xf] %v1000
        %1033 = vst [vmem:[%s310 + $0x18] sm:$0xf] %v1001
        %1034 = vst [vmem:[%s310 + $0x1c] sm:$0xf] %v1002
        %1035 = vst [vmem:[%s310 + $0x20] sm:$0xf] %v1003
        %1036 = vst [vmem:[%s310 + $0x24] sm:$0xf] %v1004
        %1037 = vst [vmem:[%s310 + $0x28] sm:$0xf] %v1005
        %1038 = vst [vmem:[%s310 + $0x2c] sm:$0xf] %v1006
        %1039 = vst [vmem:[%s310 + $0x30] sm:$0xf] %v1007
        %1040 = vst [vmem:[%s310 + $0x34] sm:$0xf] %v1008
        %1041 = vst [vmem:[%s310 + $0x38] sm:$0xf] %v1009
        %1042 = vst [vmem:[%s310 + $0x3c] sm:$0xf] %v1010
        %v1043 = vpack.c.bf16 %v778, %v774
        %v1044 = vpack.c.bf16 %v788, %v784
        %v1045 = vpack.c.bf16 %v798, %v794
        %v1046 = vpack.c.bf16 %v808, %v804
        %v1047 = vpack.c.bf16 %v818, %v814
        %v1048 = vpack.c.bf16 %v828, %v824
        %v1049 = vpack.c.bf16 %v838, %v834
        %v1050 = vpack.c.bf16 %v848, %v844
        %v1059 = vunpack.c.l.b16 %v1043
        %v1060 = vunpack.c.h.b16 %v1043
        %v1061 = vunpack.c.l.b16 %v1044
        %v1062 = vunpack.c.h.b16 %v1044
        %v1063 = vunpack.c.l.b16 %v1045
        %v1064 = vunpack.c.h.b16 %v1045
        %v1065 = vunpack.c.l.b16 %v1046
        %v1066 = vunpack.c.h.b16 %v1046
        %v1067 = vunpack.c.l.b16 %v1047
        %v1068 = vunpack.c.h.b16 %v1047
        %v1069 = vunpack.c.l.b16 %v1048
        %v1070 = vunpack.c.h.b16 %v1048
        %v1071 = vunpack.c.l.b16 %v1049
        %v1072 = vunpack.c.h.b16 %v1049
        %v1073 = vunpack.c.l.b16 %v1050
        %v1074 = vunpack.c.h.b16 %v1050
        %v1075 = vpack.c.b16 %v1059, %v1059
        %v1076 = vpack.c.b16 %v1060, %v1060
        %v1077 = vpack.c.b16 %v1061, %v1061
        %v1078 = vpack.c.b16 %v1062, %v1062
        %v1079 = vpack.c.b16 %v1063, %v1063
        %v1080 = vpack.c.b16 %v1064, %v1064
        %v1081 = vpack.c.b16 %v1065, %v1065
        %v1082 = vpack.c.b16 %v1066, %v1066
        %v1083 = vpack.c.b16 %v1067, %v1067
        %v1084 = vpack.c.b16 %v1068, %v1068
        %v1085 = vpack.c.b16 %v1069, %v1069
        %v1086 = vpack.c.b16 %v1070, %v1070
        %v1087 = vpack.c.b16 %v1071, %v1071
        %v1088 = vpack.c.b16 %v1072, %v1072
        %v1089 = vpack.c.b16 %v1073, %v1073
        %v1090 = vpack.c.b16 %v1074, %v1074
        %1107 = vst [vmem:[%s317] sm:$0xf] %v1075
        %1108 = vst [vmem:[%s317 + $0x4] sm:$0xf] %v1076
        %1109 = vst [vmem:[%s317 + $0x8] sm:$0xf] %v1077
        %1110 = vst [vmem:[%s317 + $0xc] sm:$0xf] %v1078
        %1111 = vst [vmem:[%s317 + $0x10] sm:$0xf] %v1079
        %1112 = vst [vmem:[%s317 + $0x14] sm:$0xf] %v1080
        %1113 = vst [vmem:[%s317 + $0x18] sm:$0xf] %v1081
        %1114 = vst [vmem:[%s317 + $0x1c] sm:$0xf] %v1082
        %1115 = vst [vmem:[%s317 + $0x20] sm:$0xf] %v1083
        %1116 = vst [vmem:[%s317 + $0x24] sm:$0xf] %v1084
        %1117 = vst [vmem:[%s317 + $0x28] sm:$0xf] %v1085
        %1118 = vst [vmem:[%s317 + $0x2c] sm:$0xf] %v1086
        %1119 = vst [vmem:[%s317 + $0x30] sm:$0xf] %v1087
        %1120 = vst [vmem:[%s317 + $0x34] sm:$0xf] %v1088
        %1121 = vst [vmem:[%s317 + $0x38] sm:$0xf] %v1089
        %1122 = vst [vmem:[%s317 + $0x3c] sm:$0xf] %v1090
        %v1123 = vpack.c.bf16 %v888, %v885
        %v1124 = vpack.c.bf16 %v896, %v893
        %v1125 = vpack.c.bf16 %v904, %v901
        %v1126 = vpack.c.bf16 %v912, %v909
        %v1127 = vpack.c.bf16 %v920, %v917
        %v1128 = vpack.c.bf16 %v928, %v925
        %v1129 = vpack.c.bf16 %v936, %v933
        %v1130 = vpack.c.bf16 %v944, %v941
        %v1139 = vunpack.c.l.b16 %v1123
        %v1140 = vunpack.c.h.b16 %v1123
        %v1141 = vunpack.c.l.b16 %v1124
        %v1142 = vunpack.c.h.b16 %v1124
        %v1143 = vunpack.c.l.b16 %v1125
        %v1144 = vunpack.c.h.b16 %v1125
        %v1145 = vunpack.c.l.b16 %v1126
        %v1146 = vunpack.c.h.b16 %v1126
        %v1147 = vunpack.c.l.b16 %v1127
        %v1148 = vunpack.c.h.b16 %v1127
        %v1149 = vunpack.c.l.b16 %v1128
        %v1150 = vunpack.c.h.b16 %v1128
        %v1151 = vunpack.c.l.b16 %v1129
        %v1152 = vunpack.c.h.b16 %v1129
        %v1153 = vunpack.c.l.b16 %v1130
        %v1154 = vunpack.c.h.b16 %v1130
        %v1155 = vpack.c.b16 %v1139, %v1139
        %v1156 = vpack.c.b16 %v1140, %v1140
        %v1157 = vpack.c.b16 %v1141, %v1141
        %v1158 = vpack.c.b16 %v1142, %v1142
        %v1159 = vpack.c.b16 %v1143, %v1143
        %v1160 = vpack.c.b16 %v1144, %v1144
        %v1161 = vpack.c.b16 %v1145, %v1145
        %v1162 = vpack.c.b16 %v1146, %v1146
        %v1163 = vpack.c.b16 %v1147, %v1147
        %v1164 = vpack.c.b16 %v1148, %v1148
        %v1165 = vpack.c.b16 %v1149, %v1149
        %v1166 = vpack.c.b16 %v1150, %v1150
        %v1167 = vpack.c.b16 %v1151, %v1151
        %v1168 = vpack.c.b16 %v1152, %v1152
        %v1169 = vpack.c.b16 %v1153, %v1153
        %v1170 = vpack.c.b16 %v1154, %v1154
        %1187 = vst [vmem:[%s324] sm:$0xf] %v1155
        %1188 = vst [vmem:[%s324 + $0x4] sm:$0xf] %v1156
        %1189 = vst [vmem:[%s324 + $0x8] sm:$0xf] %v1157
        %1190 = vst [vmem:[%s324 + $0xc] sm:$0xf] %v1158
        %1191 = vst [vmem:[%s324 + $0x10] sm:$0xf] %v1159
        %1192 = vst [vmem:[%s324 + $0x14] sm:$0xf] %v1160
        %1193 = vst [vmem:[%s324 + $0x18] sm:$0xf] %v1161
        %1194 = vst [vmem:[%s324 + $0x1c] sm:$0xf] %v1162
        %1195 = vst [vmem:[%s324 + $0x20] sm:$0xf] %v1163
        %1196 = vst [vmem:[%s324 + $0x24] sm:$0xf] %v1164
        %1197 = vst [vmem:[%s324 + $0x28] sm:$0xf] %v1165
        %1198 = vst [vmem:[%s324 + $0x2c] sm:$0xf] %v1166
        %1199 = vst [vmem:[%s324 + $0x30] sm:$0xf] %v1167
        %1200 = vst [vmem:[%s324 + $0x34] sm:$0xf] %v1168
        %1201 = vst [vmem:[%s324 + $0x38] sm:$0xf] %v1169
        %1202 = vst [vmem:[%s324 + $0x3c] sm:$0xf] %v1170
        %s1203 = sand.u32 %s141, 1
        %s1204 = scalar_lea.sflag [#allocation4], %s1203
        %s1205 = sand.u32 %s141, 1
        %s1206 = smul.addr %s1205, 64
        %s1207 = scalar_lea.vmem [#allocation7], %s1206
        %s1208 = sand.u32 %s28, 1
        %s1209 = scalar_lea.sflag [#allocation9], %s1208
        %s1210 = sand.u32 %s169, 1
        %s1211 = smul.addr %s1210, 64
        %s1212 = scalar_lea.vmem [#allocation8], %s1211
        %s1213 = sand.u32 %s28, 1
        %s1214 = scalar_lea.sflag [#allocation9], %s1213
        %s1215 = sand.u32 %s197, 1
        %s1216 = smul.addr %s1215, 64
        %s1217 = scalar_lea.vmem [#allocation10], %s1216
        // Predicated region
        $region45: #{tpu_custom_call.1} parent=35 // pred_check
          %p1218 = pneg %p151
        $region46: #{tpu_custom_call.1} parent=35 // pred_check_branch
          %1220 = sbr.rel (%p1218) target = $region48
        $region47: #{tpu_custom_call.1} parent=35 // pred_region
          %s1221 = smul.u32 16, %s33
          %s1223 = ssub.s32 1024, 1024
          %1224 = vsyncadd %s1204, %s1223
          %s1225 = smul.addr %s32, 32
          %s1226 = sadd.s32 %s1221, %s1225
          %s1227 = smul.addr %s1226, 64
          %s1228 = scalar_lea.hbm %s4, %s1227
          %s1229 = sshll.u32 %s1207, 4
          %s1230 = int_to_ptr.vmem [resolvable:$true] %s1229
          %1235 = dma.vmem_to_hbm [thread:$0]  %s1230, 1024, %s1228, %s1204, 64, 64, 4
        $region48: #{tpu_custom_call.1} parent=35 // pred_fallthru
          _
        // Predicated region
        $region49: #{tpu_custom_call.1} parent=35 // pred_check
          %p1236 = pneg %p179
        $region50: #{tpu_custom_call.1} parent=35 // pred_check_branch
          %1238 = sbr.rel (%p1236) target = $region52
        $region51: #{tpu_custom_call.1} parent=35 // pred_region
          %s1239 = smul.u32 16, %s33
          %s1241 = ssub.s32 1024, 1024
          %1242 = vsyncadd %s1209, %s1241
          %s1243 = smul.addr %s32, 32
          %s1244 = sadd.s32 %s1239, %s1243
          %s1245 = smul.addr %s1244, 64
          %s1246 = scalar_lea.hbm %s5, %s1245
          %s1247 = sshll.u32 %s1212, 4
          %s1248 = int_to_ptr.vmem [resolvable:$true] %s1247
          %1253 = dma.vmem_to_hbm [thread:$0]  %s1248, 1024, %s1246, %s1209, 64, 64, 4
        $region52: #{tpu_custom_call.1} parent=35 // pred_fallthru
          _
        // Predicated region
        $region53: #{tpu_custom_call.1} parent=35 // pred_check
          %p1254 = pneg %p207
        $region54: #{tpu_custom_call.1} parent=35 // pred_check_branch
          %1256 = sbr.rel (%p1254) target = $region56
        $region55: #{tpu_custom_call.1} parent=35 // pred_region
          %s1257 = smul.u32 16, %s33
          %s1259 = ssub.s32 1024, 1024
          %1260 = vsyncadd %s1214, %s1259
          %s1261 = smul.addr %s32, 32
          %s1262 = sadd.s32 %s1257, %s1261
          %s1263 = smul.addr %s1262, 64
          %s1264 = scalar_lea.hbm %s6, %s1263
          %s1265 = sshll.u32 %s1217, 4
          %s1266 = int_to_ptr.vmem [resolvable:$true] %s1265
          %1271 = dma.vmem_to_hbm [thread:$0]  %s1266, 1024, %s1264, %s1214, 64, 64, 4
        $region56: #{tpu_custom_call.1} parent=35 // pred_fallthru
          _
      $region36: #{tpu_custom_call.1} parent=5 // pred_fallthru
        _
      %p1272 = scmp.le.s32.totalorder 2, %s23
      // Predicated region
      $region57: #{tpu_custom_call.1} parent=5 // pred_check
        %p1273 = pneg %p1272
      $region58: #{tpu_custom_call.1} parent=5 // pred_check_branch
        %1275 = sbr.rel (%p1273) target = $region60
      $region59: #{tpu_custom_call.1} parent=5 // pred_region
        %s1276 = ssub.s32 %s23, 2
        // Predicated region
        $region61: #{tpu_custom_call.1} parent=59 // pred_check
          %p1277 = pneg %p157
        $region62: #{tpu_custom_call.1} parent=59 // pred_check_branch
          %1279 = sbr.rel (%p1277) target = $region64
        $region63: #{tpu_custom_call.1} parent=59 // pred_region
          %s1280 = sand.u32 %s142, 1
          %s1281 = scalar_lea.sflag [#allocation4], %s1280
          %s1282 = sand.u32 %s142, 1
          %s1283 = smul.addr %s1282, 64
          %s1284 = scalar_lea.vmem [#allocation7], %s1283
          %1285 = dma.done %s1281, 1024
        $region64: #{tpu_custom_call.1} parent=59 // pred_fallthru
          _
        // Predicated region
        $region65: #{tpu_custom_call.1} parent=59 // pred_check
          %p1286 = pneg %p185
        $region66: #{tpu_custom_call.1} parent=59 // pred_check_branch
          %1288 = sbr.rel (%p1286) target = $region68
        $region67: #{tpu_custom_call.1} parent=59 // pred_region
          %s1289 = sand.u32 %s29, 1
          %s1290 = scalar_lea.sflag [#allocation9], %s1289
          %s1291 = sand.u32 %s170, 1
          %s1292 = smul.addr %s1291, 64
          %s1293 = scalar_lea.vmem [#allocation8], %s1292
          %1294 = dma.done %s1290, 1024
        $region68: #{tpu_custom_call.1} parent=59 // pred_fallthru
          _
        // Predicated region
        $region69: #{tpu_custom_call.1} parent=59 // pred_check
          %p1295 = pneg %p213
        $region70: #{tpu_custom_call.1} parent=59 // pred_check_branch
          %1297 = sbr.rel (%p1295) target = $region72
        $region71: #{tpu_custom_call.1} parent=59 // pred_region
          %s1298 = sand.u32 %s29, 1
          %s1299 = scalar_lea.sflag [#allocation9], %s1298
          %s1300 = sand.u32 %s198, 1
          %s1301 = smul.addr %s1300, 64
          %s1302 = scalar_lea.vmem [#allocation10], %s1301
          %1303 = dma.done %s1299, 1024
        $region72: #{tpu_custom_call.1} parent=59 // pred_fallthru
          _
      $region60: #{tpu_custom_call.1} parent=5 // pred_fallthru
        _
    $region6: #{tpu_custom_call.1} parent=1 // loop_footer
      %s27 = sadd.s32 1, %s23
    $region7: #{tpu_custom_call.1} parent=1 // loop_footer_branch
      %22 = sbr.rel target = $region3
    $region8: #{tpu_custom_call.1} parent=1 // loop_exit
      _
    %1304 = vsyncpa [#allocation3], 1
    %s1305 = scalar_lea.sflag [#allocation3], 1
    %1306 = vsyncpa %s1305, 1
    %1307 = vsyncpa [#allocation6], 1
    %1308 = vsyncpa [#allocation4], 1
    %s1309 = scalar_lea.sflag [#allocation4], 1
    %1310 = vsyncpa %s1309, 1
    %1311 = vsyncpa [#allocation9], 1
    %s1312 = scalar_lea.sflag [#allocation9], 1
    %1313 = vsyncpa %s1312, 1

</llo_original>
